<compile_context>
chip_gen: v7x
topology: tpu7x:2x2x1
jax: 0.10.0
libtpu: 0.0.40
codegen_flags: <defaults>
</compile_context>

<pallas_src>
import jax
import jax.numpy as jnp
from jax import lax
from jax.experimental import pallas as pl
from jax.experimental.pallas import tpu as pltpu


# ----------------------------------------------------------------------------
# helpers
# ----------------------------------------------------------------------------
def _round_up(x, m):
    return -(-x // m) * m


def _largest_divisor_le(n, cap):
    for d in range(min(n, cap), 0, -1):
        if n % d == 0:
            return d
    return 1


def _vmem_limit(step_bytes):
    # ~2x step for double-buffering plus slack; clamp <= 40 MiB so the scoped
    # request keeps headroom under v7x's 64 MiB physical VMEM per core.
    return int(min(max(3 * step_bytes, 16 * 1024 * 1024), 40 * 1024 * 1024))


def _mxu_step_bytes(mblk, b, ci2, co2):
    # Per-grid-step VMEM block footprint, accounting for (sublane, lane) tile
    # padding of the minor dims (bf16 sublane tile = 16, f32 = 8, lane = 128).
    a = mblk * _round_up(b, 16) * _round_up(ci2, 128) * 2     # bf16 activations
    w = mblk * _round_up(ci2, 16) * _round_up(co2, 128) * 2   # bf16 weights
    o = mblk * _round_up(b, 8) * _round_up(co2, 128) * 4      # f32 output
    return a + w + o


def _vpu_step_bytes(mblk, b, ci, co):
    a = 2 * ci * _round_up(b, 8) * mblk * 4      # re+im activations (f32)
    w = 2 * ci * _round_up(co, 8) * mblk * 4     # re+im weights
    o = 2 * b * _round_up(co, 8) * mblk * 4      # re+im outputs
    return a + w + o


def _pick_lane_tile(m_total, cap):
    """Lane-dense mode tiling: (padded_total, tile) with tile % 128 == 0."""
    LANE = 128
    cap = max(LANE, (cap // LANE) * LANE)
    mp = _round_up(m_total, LANE)
    if mp <= cap:
        return mp, mp
    n = mp // LANE
    best = max(d for d in range(1, n + 1) if n % d == 0 and d * LANE <= cap)
    mblk = best * LANE
    if mblk < min(512, cap):
        # Degenerate divisor (e.g. prime lane-chunk count): pad to a friendlier
        # multiple rather than collapsing to 128-wide tiles.
        mblk = min(512, cap)
        mp = _round_up(m_total, mblk)
    return mp, mblk


# ----------------------------------------------------------------------------
# Weight preparation (hoisted out of the per-call forward path)
# ----------------------------------------------------------------------------
def prepare_spectral_weights(weights1, weights2, use_mxu):
    """Pre-lay-out the spectral weights once at parameter-init time.

    weights1/2: (Ci, Co, m1, m2) complex64.
    MXU path : {"w_mxu": (2*m1*m2, 2*Ci, 2*Co) bf16}  mode-major real-block form
               W' = [[Re w, Im w], [-Im w, Re w]]  so [Re a | Im a] @ W' = [Re(aw) | Im(aw)].
    VPU path : {"w_vpu": (w_re, w_im)} each (Ci, Co, 2*m1*m2) float32, Ci leading.
    """
    ci, co, m1, m2 = weights1.shape
    m = m1 * m2
    w = jnp.stack([weights1, weights2], axis=0).reshape(2, ci, co, m)
    if use_mxu:
        wm = jnp.transpose(w, (0, 3, 1, 2)).reshape(2 * m, ci, co)   # mode-major
        wr = jnp.real(wm).astype(jnp.float32)
        wi = jnp.imag(wm).astype(jnp.float32)
        w_blk = jnp.concatenate(
            [jnp.concatenate([wr, wi], axis=-1),
             jnp.concatenate([-wi, wr], axis=-1)], axis=-2)          # (2M, 2Ci, 2Co)
        return {"w_mxu": w_blk.astype(jnp.bfloat16)}
    wv = jnp.transpose(w, (1, 2, 0, 3)).reshape(ci, co, 2 * m)       # (Ci, Co, 2M)
    return {"w_vpu": (jnp.real(wv).astype(jnp.float32),
                      jnp.imag(wv).astype(jnp.float32))}


# ----------------------------------------------------------------------------
# VPU path: lane-dense elementwise contraction (small Ci/Co), f32 math
# ----------------------------------------------------------------------------
def _spectral_mul_vpu_kernel(ar_ref, ai_ref, wr_ref, wi_ref, or_ref, oi_ref):
    """One mode-tile block (Ci-leading layout).

    ar/ai : (Ci, B, Mblk)   truncated spectrum, real / imag
    wr/wi : (Ci, Co, Mblk)  spectral weights, real / imag
    or/oi : (B, Co, Mblk)   output spectrum, real / imag
    """
    ci = ar_ref.shape[0]

    def term(i):
        a_r = ar_ref[i][:, None, :]    # (B, 1, Mblk) -- leading-axis view, cheap
        a_i = ai_ref[i][:, None, :]
        w_r = wr_ref[i][None, :, :]    # (1, Co, Mblk)
        w_i = wi_ref[i][None, :, :]
        return a_r * w_r - a_i * w_i, a_r * w_i + a_i * w_r

    acc_re, acc_im = term(0)
    for i in range(1, ci):             # Ci is small & static on this path
        t_re, t_im = term(i)
        acc_re = acc_re + t_re
        acc_im = acc_im + t_im

    or_ref[...] = acc_re
    oi_ref[...] = acc_im


def _spectral_mul_vpu(a_re, a_im, w_re, w_im):
    """a_*: (Ci, B, Mtot) f32, w_*: (Ci, Co, Mtot) f32 -> (B, Co, Mtot) re/im."""
    ci, b, m_total = a_re.shape
    co = w_re.shape[1]

    budget = 10 * 1024 * 1024
    per_lane = _vpu_step_bytes(1, b, ci, co)
    cap = max(128, min(1024, (budget // per_lane) // 128 * 128))
    mp, mblk = _pick_lane_tile(m_total, cap)

    pad = mp - m_total
    if pad:
        pw3 = ((0, 0), (0, 0), (0, pad))
        a_re = jnp.pad(a_re, pw3)
        a_im = jnp.pad(a_im, pw3)
        w_re = jnp.pad(w_re, pw3)       # zero weights -> zero padded outputs
        w_im = jnp.pad(w_im, pw3)

    grid = (mp // mblk,)
    in_spec_a = pl.BlockSpec((ci, b, mblk), lambda m: (0, 0, m))
    in_spec_w = pl.BlockSpec((ci, co, mblk), lambda m: (0, 0, m))
    out_spec = pl.BlockSpec((b, co, mblk), lambda m: (0, 0, m))
    out_shape = jax.ShapeDtypeStruct((b, co, mp), jnp.float32)

    o_re, o_im = pl.pallas_call(
        _spectral_mul_vpu_kernel,
        out_shape=(out_shape, out_shape),
        grid=grid,
        in_specs=[in_spec_a, in_spec_a, in_spec_w, in_spec_w],
        out_specs=(out_spec, out_spec),
        compiler_params=pltpu.CompilerParams(
            dimension_semantics=("parallel",),
            vmem_limit_bytes=_vmem_limit(_vpu_step_bytes(mblk, b, ci, co)),
        ),
    )(a_re, a_im, w_re, w_im)

    return o_re[..., :m_total], o_im[..., :m_total]


# ----------------------------------------------------------------------------
# MXU path: complex-as-real 2x2 block matmul, bf16 in / f32 accumulate
# ----------------------------------------------------------------------------
def _spectral_mul_mxu_kernel(a_ref, w_ref, o_ref):
    """One mode-tile block, mode-major layout.

    a : (Mblk, B, 2*Ci)   bf16, [Re | Im] stacked along channels
    w : (Mblk, 2*Ci, 2*Co) bf16, real-block form [[Re,Im],[-Im,Re]]
    o : (Mblk, B, 2*Co)   f32, [Re | Im]
    """
    dn = (((2,), (1,)), ((0,), (0,)))     # contract stacked channels, batch modes
    o_ref[...] = lax.dot_general(a_ref[...], w_ref[...], dn,
                                 preferred_element_type=jnp.float32)


def _spectral_mul_mxu(a_stk, w_blk):
    """a_stk: (Mtot, B, 2Ci) bf16, w_blk: (Mtot, 2Ci, 2Co) bf16 -> (Mtot, B, 2Co) f32."""
    m_total, b, ci2 = a_stk.shape
    co2 = w_blk.shape[-1]

    budget = 10 * 1024 * 1024
    per_mode = _mxu_step_bytes(1, b, ci2, co2)
    cap = int(max(8, min(256, budget // per_mode)))

    mblk = _largest_divisor_le(m_total, cap)
    mp = m_total
    if mblk < min(32, cap, m_total):
        # Degenerate divisor (rare): pad the mode axis for this call only.
        mblk = min(cap, 128)
        mp = _round_up(m_total, mblk)
        pad = mp - m_total
        a_stk = jnp.pad(a_stk, ((0, pad), (0, 0), (0, 0)))
        w_blk = jnp.pad(w_blk, ((0, pad), (0, 0), (0, 0)))

    grid = (mp // mblk,)
    out = pl.pallas_call(
        _spectral_mul_mxu_kernel,
        out_shape=jax.ShapeDtypeStruct((mp, b, co2), jnp.float32),
        grid=grid,
        in_specs=[pl.BlockSpec((mblk, b, ci2), lambda m: (m, 0, 0)),
                  pl.BlockSpec((mblk, ci2, co2), lambda m: (m, 0, 0))],
        out_specs=pl.BlockSpec((mblk, b, co2), lambda m: (m, 0, 0)),
        compiler_params=pltpu.CompilerParams(
            dimension_semantics=("parallel",),
            vmem_limit_bytes=_vmem_limit(_mxu_step_bytes(mblk, b, ci2, co2)),
        ),
    )(a_stk, w_blk)

    return out[:m_total]


# ----------------------------------------------------------------------------
# Forward pass (matches the PyTorch SpectralConv2d)
# ----------------------------------------------------------------------------
def spectral_conv2d(x, weights1, weights2, modes1, modes2, use_mxu=None, prepared=None):
    """x: (B, Cin, H, W) f32; weights*: (Cin, Cout, m1, m2) c64 -> (B, Cout, H, W) f32.

    `prepared` (from prepare_spectral_weights) hoists the weight layout work out
    of the forward path; if omitted it is built here (same semantics, extra cost).
    """
    b, ci, h, w = x.shape
    co = weights1.shape[1]
    wf = w // 2 + 1
    m = modes1 * modes2
    m_tot = 2 * m

    if use_mxu is None:
        if prepared is not None:
            use_mxu = "w_mxu" in prepared
        else:
            # 2x2 real-block stacking doubles the contraction width, but the
            # 256x256 MXU on v6e/v7x still wants >= 64 channels to fill well;
            # override explicitly (e.g. True at Ci=Co=32 on v5e's 128x128 MXU).
            use_mxu = min(ci, co) >= 64
    if prepared is None:
        prepared = prepare_spectral_weights(weights1, weights2, use_mxu)

    # FFT (plain JAX) and gather of both retained mode corners
    # (matches torch's [:m1] and [-m1:] slicing).
    x_ft = jnp.fft.rfft2(x)                                   # (B, Ci, H, Wf) c64
    top = x_ft[:, :, :modes1, :modes2].reshape(b, ci, m)
    bot = x_ft[:, :, h - modes1:, :modes2].reshape(b, ci, m)

    if use_mxu:
        a = jnp.stack([top, bot], axis=0)                     # (2, B, Ci, M)
        a = jnp.transpose(a, (0, 3, 1, 2)).reshape(m_tot, b, ci)   # mode-major
        a_stk = jnp.concatenate([jnp.real(a), jnp.imag(a)],
                                axis=-1).astype(jnp.bfloat16)      # (Mtot, B, 2Ci)
        o = _spectral_mul_mxu(a_stk, prepared["w_mxu"])            # (Mtot, B, 2Co) f32
        o_c = (o[..., :co] + 1j * o[..., co:]).astype(jnp.complex64)
        o_c = jnp.transpose(o_c.reshape(2, modes1, modes2, b, co), (0, 3, 4, 1, 2))
    else:
        a = jnp.concatenate([top, bot], axis=-1)              # (B, Ci, 2M)
        a = jnp.transpose(a, (1, 0, 2))                       # (Ci, B, 2M) Ci-leading
        a_re = jnp.real(a).astype(jnp.float32)
        a_im = jnp.imag(a).astype(jnp.float32)
        w_re, w_im = prepared["w_vpu"]
        o_re, o_im = _spectral_mul_vpu(a_re, a_im, w_re, w_im)     # (B, Co, 2M)
        o_c = (o_re + 1j * o_im).astype(jnp.complex64)
        o_c = jnp.transpose(o_c.reshape(b, co, 2, modes1, modes2), (2, 0, 1, 3, 4))

    # Scatter into the zero-initialized full spectrum and invert the FFT.
    out_ft = jnp.zeros((b, co, h, wf), dtype=jnp.complex64)
    out_ft = out_ft.at[:, :, :modes1, :modes2].set(o_c[0])
    out_ft = out_ft.at[:, :, h - modes1:, :modes2].set(o_c[1])

    return jnp.fft.irfft2(out_ft, s=(h, w)).astype(jnp.float32)


def _reference_forward(x, weights1, weights2, modes1, modes2):
    """Pure-JAX reference reproducing the PyTorch forward exactly."""
    b, ci, h, w = x.shape
    co = weights1.shape[1]
    x_ft = jnp.fft.rfft2(x)
    out_ft = jnp.zeros((b, co, h, w // 2 + 1), dtype=jnp.complex64)
    out_ft = out_ft.at[:, :, :modes1, :modes2].set(
        jnp.einsum("bixy,ioxy->boxy", x_ft[:, :, :modes1, :modes2], weights1))
    out_ft = out_ft.at[:, :, h - modes1:, :modes2].set(
        jnp.einsum("bixy,ioxy->boxy", x_ft[:, :, h - modes1:, :modes2], weights2))
    return jnp.fft.irfft2(out_ft, s=(h, w)).astype(jnp.float32)


if __name__ == "__main__":
    # ---- small test consistent with the module (VPU path, Ci=Co=4) ----------
    B, Cin, Cout = 2, 4, 4
    H, W = 16, 16
    modes1, modes2 = 4, 4

    key = jax.random.PRNGKey(0)
    kx, kw1r, kw1i, kw2r, kw2i = jax.random.split(key, 5)

    x = jax.random.normal(kx, (B, Cin, H, W), dtype=jnp.float32)

    scale = 1.0 / (Cin * Cout)
    # torch.rand(..., dtype=torch.cfloat) -> uniform [0,1) real and imag parts.
    w1 = (scale * (jax.random.uniform(kw1r, (Cin, Cout, modes1, modes2))
                   + 1j * jax.random.uniform(kw1i, (Cin, Cout, modes1, modes2)))
          ).astype(jnp.complex64)
    w2 = (scale * (jax.random.uniform(kw2r, (Cin, Cout, modes1, modes2))
                   + 1j * jax.random.uniform(kw2i, (Cin, Cout, modes1, modes2)))
          ).astype(jnp.complex64)

    prep_vpu = prepare_spectral_weights(w1, w2, use_mxu=False)   # hoisted, once
    out = jax.block_until_ready(
        spectral_conv2d(x, w1, w2, modes1, modes2, prepared=prep_vpu))
    ref = jax.block_until_ready(_reference_forward(x, w1, w2, modes1, modes2))
    assert out.shape == (B, Cout, H, W)
    assert jnp.allclose(out, ref, atol=1e-5, rtol=1e-5), "VPU path mismatch vs reference"

    # ---- also exercise the MXU path (production-style channel counts) -------
    B2, C2 = 8, 32
    k2 = jax.random.PRNGKey(1)
    kx2, ka, kb, kc, kd = jax.random.split(k2, 5)
    x2 = jax.random.normal(kx2, (B2, C2, H, W), dtype=jnp.float32)
    s2 = 1.0 / (C2 * C2)
    w1b = (s2 * (jax.random.uniform(ka, (C2, C2, modes1, modes2))
                 + 1j * jax.random.uniform(kb, (C2, C2, modes1, modes2)))).astype(jnp.complex64)
    w2b = (s2 * (jax.random.uniform(kc, (C2, C2, modes1, modes2))
                 + 1j * jax.random.uniform(kd, (C2, C2, modes1, modes2)))).astype(jnp.complex64)

    prep_mxu = prepare_spectral_weights(w1b, w2b, use_mxu=True)  # hoisted, once
    out2 = jax.block_until_ready(
        spectral_conv2d(x2, w1b, w2b, modes1, modes2, use_mxu=True, prepared=prep_mxu))
    ref2 = jax.block_until_ready(_reference_forward(x2, w1b, w2b, modes1, modes2))
    assert out2.shape == (B2, C2, H, W)
    # bf16 MXU inputs with f32 accumulation -> looser tolerance is genuinely needed.
    assert jnp.allclose(out2, ref2, atol=2e-3, rtol=2e-3), "MXU path mismatch vs reference"

    print("KERNEL_OK")
</pallas_src>

<mosaic_0001>
module attributes {stable_mosaic.version = 11 : i64} {
  func.func @_spectral_mul_vpu_kernel(%arg0: i32, %arg1: memref<4x2x128xf32, #tpu.memory_space<vmem>>, %arg2: memref<4x2x128xf32, #tpu.memory_space<vmem>>, %arg3: memref<4x4x128xf32, #tpu.memory_space<vmem>>, %arg4: memref<4x4x128xf32, #tpu.memory_space<vmem>>, %arg5: memref<2x4x128xf32, #tpu.memory_space<vmem>>, %arg6: memref<2x4x128xf32, #tpu.memory_space<vmem>>) attributes {dimension_semantics = [#tpu.dimension_semantics<parallel>], iteration_bounds = array<i64: 1>, scalar_prefetch = 0 : i64, scratch_operands = 0 : i64, tpu.core_type = #tpu.core_type<tc>, window_params = [{transform_indices = @transform_0, window_bounds = array<i64: 4, 2, 128>}, {transform_indices = @transform_1, window_bounds = array<i64: 4, 2, 128>}, {transform_indices = @transform_2, window_bounds = array<i64: 4, 4, 128>}, {transform_indices = @transform_3, window_bounds = array<i64: 4, 4, 128>}, {transform_indices = @transform_4, window_bounds = array<i64: 2, 4, 128>}, {transform_indices = @transform_5, window_bounds = array<i64: 2, 4, 128>}]} {
    %c0 = arith.constant 0 : index
    %c0_0 = arith.constant 0 : index
    %c0_1 = arith.constant 0 : index
    %0 = vector.load %arg1[%c0, %c0_0, %c0_1] : memref<4x2x128xf32, #tpu.memory_space<vmem>>, vector<1x2x128xf32>
    %1 = vector.shape_cast %0 : vector<1x2x128xf32> to vector<2x128xf32>
    %2 = vector.shape_cast %1 : vector<2x128xf32> to vector<2x1x128xf32>
    %c0_2 = arith.constant 0 : index
    %c0_3 = arith.constant 0 : index
    %c0_4 = arith.constant 0 : index
    %3 = vector.load %arg2[%c0_2, %c0_3, %c0_4] : memref<4x2x128xf32, #tpu.memory_space<vmem>>, vector<1x2x128xf32>
    %4 = vector.shape_cast %3 : vector<1x2x128xf32> to vector<2x128xf32>
    %5 = vector.shape_cast %4 : vector<2x128xf32> to vector<2x1x128xf32>
    %c0_5 = arith.constant 0 : index
    %c0_6 = arith.constant 0 : index
    %c0_7 = arith.constant 0 : index
    %6 = vector.load %arg3[%c0_5, %c0_6, %c0_7] : memref<4x4x128xf32, #tpu.memory_space<vmem>>, vector<1x4x128xf32>
    %7 = vector.shape_cast %6 : vector<1x4x128xf32> to vector<4x128xf32>
    %8 = vector.shape_cast %7 : vector<4x128xf32> to vector<1x4x128xf32>
    %c0_8 = arith.constant 0 : index
    %c0_9 = arith.constant 0 : index
    %c0_10 = arith.constant 0 : index
    %9 = vector.load %arg4[%c0_8, %c0_9, %c0_10] : memref<4x4x128xf32, #tpu.memory_space<vmem>>, vector<1x4x128xf32>
    %10 = vector.shape_cast %9 : vector<1x4x128xf32> to vector<4x128xf32>
    %11 = vector.shape_cast %10 : vector<4x128xf32> to vector<1x4x128xf32>
    %12 = vector.broadcast %2 : vector<2x1x128xf32> to vector<2x4x128xf32>
    %13 = vector.broadcast %8 : vector<1x4x128xf32> to vector<2x4x128xf32>
    %14 = arith.mulf %12, %13 : vector<2x4x128xf32>
    %15 = vector.broadcast %5 : vector<2x1x128xf32> to vector<2x4x128xf32>
    %16 = vector.broadcast %11 : vector<1x4x128xf32> to vector<2x4x128xf32>
    %17 = arith.mulf %15, %16 : vector<2x4x128xf32>
    %18 = arith.subf %14, %17 : vector<2x4x128xf32>
    %19 = vector.broadcast %2 : vector<2x1x128xf32> to vector<2x4x128xf32>
    %20 = vector.broadcast %11 : vector<1x4x128xf32> to vector<2x4x128xf32>
    %21 = arith.mulf %19, %20 : vector<2x4x128xf32>
    %22 = vector.broadcast %5 : vector<2x1x128xf32> to vector<2x4x128xf32>
    %23 = vector.broadcast %8 : vector<1x4x128xf32> to vector<2x4x128xf32>
    %24 = arith.mulf %22, %23 : vector<2x4x128xf32>
    %25 = arith.addf %21, %24 : vector<2x4x128xf32>
    %c1 = arith.constant 1 : index
    %c0_11 = arith.constant 0 : index
    %c0_12 = arith.constant 0 : index
    %26 = vector.load %arg1[%c1, %c0_11, %c0_12] : memref<4x2x128xf32, #tpu.memory_space<vmem>>, vector<1x2x128xf32>
    %27 = vector.shape_cast %26 : vector<1x2x128xf32> to vector<2x128xf32>
    %28 = vector.shape_cast %27 : vector<2x128xf32> to vector<2x1x128xf32>
    %c1_13 = arith.constant 1 : index
    %c0_14 = arith.constant 0 : index
    %c0_15 = arith.constant 0 : index
    %29 = vector.load %arg2[%c1_13, %c0_14, %c0_15] : memref<4x2x128xf32, #tpu.memory_space<vmem>>, vector<1x2x128xf32>
    %30 = vector.shape_cast %29 : vector<1x2x128xf32> to vector<2x128xf32>
    %31 = vector.shape_cast %30 : vector<2x128xf32> to vector<2x1x128xf32>
    %c1_16 = arith.constant 1 : index
    %c0_17 = arith.constant 0 : index
    %c0_18 = arith.constant 0 : index
    %32 = vector.load %arg3[%c1_16, %c0_17, %c0_18] : memref<4x4x128xf32, #tpu.memory_space<vmem>>, vector<1x4x128xf32>
    %33 = vector.shape_cast %32 : vector<1x4x128xf32> to vector<4x128xf32>
    %34 = vector.shape_cast %33 : vector<4x128xf32> to vector<1x4x128xf32>
    %c1_19 = arith.constant 1 : index
    %c0_20 = arith.constant 0 : index
    %c0_21 = arith.constant 0 : index
    %35 = vector.load %arg4[%c1_19, %c0_20, %c0_21] : memref<4x4x128xf32, #tpu.memory_space<vmem>>, vector<1x4x128xf32>
    %36 = vector.shape_cast %35 : vector<1x4x128xf32> to vector<4x128xf32>
    %37 = vector.shape_cast %36 : vector<4x128xf32> to vector<1x4x128xf32>
    %38 = vector.broadcast %28 : vector<2x1x128xf32> to vector<2x4x128xf32>
    %39 = vector.broadcast %34 : vector<1x4x128xf32> to vector<2x4x128xf32>
    %40 = arith.mulf %38, %39 : vector<2x4x128xf32>
    %41 = vector.broadcast %31 : vector<2x1x128xf32> to vector<2x4x128xf32>
    %42 = vector.broadcast %37 : vector<1x4x128xf32> to vector<2x4x128xf32>
    %43 = arith.mulf %41, %42 : vector<2x4x128xf32>
    %44 = arith.subf %40, %43 : vector<2x4x128xf32>
    %45 = vector.broadcast %28 : vector<2x1x128xf32> to vector<2x4x128xf32>
    %46 = vector.broadcast %37 : vector<1x4x128xf32> to vector<2x4x128xf32>
    %47 = arith.mulf %45, %46 : vector<2x4x128xf32>
    %48 = vector.broadcast %31 : vector<2x1x128xf32> to vector<2x4x128xf32>
    %49 = vector.broadcast %34 : vector<1x4x128xf32> to vector<2x4x128xf32>
    %50 = arith.mulf %48, %49 : vector<2x4x128xf32>
    %51 = arith.addf %47, %50 : vector<2x4x128xf32>
    %52 = arith.addf %18, %44 : vector<2x4x128xf32>
    %53 = arith.addf %25, %51 : vector<2x4x128xf32>
    %c2 = arith.constant 2 : index
    %c0_22 = arith.constant 0 : index
    %c0_23 = arith.constant 0 : index
    %54 = vector.load %arg1[%c2, %c0_22, %c0_23] : memref<4x2x128xf32, #tpu.memory_space<vmem>>, vector<1x2x128xf32>
    %55 = vector.shape_cast %54 : vector<1x2x128xf32> to vector<2x128xf32>
    %56 = vector.shape_cast %55 : vector<2x128xf32> to vector<2x1x128xf32>
    %c2_24 = arith.constant 2 : index
    %c0_25 = arith.constant 0 : index
    %c0_26 = arith.constant 0 : index
    %57 = vector.load %arg2[%c2_24, %c0_25, %c0_26] : memref<4x2x128xf32, #tpu.memory_space<vmem>>, vector<1x2x128xf32>
    %58 = vector.shape_cast %57 : vector<1x2x128xf32> to vector<2x128xf32>
    %59 = vector.shape_cast %58 : vector<2x128xf32> to vector<2x1x128xf32>
    %c2_27 = arith.constant 2 : index
    %c0_28 = arith.constant 0 : index
    %c0_29 = arith.constant 0 : index
    %60 = vector.load %arg3[%c2_27, %c0_28, %c0_29] : memref<4x4x128xf32, #tpu.memory_space<vmem>>, vector<1x4x128xf32>
    %61 = vector.shape_cast %60 : vector<1x4x128xf32> to vector<4x128xf32>
    %62 = vector.shape_cast %61 : vector<4x128xf32> to vector<1x4x128xf32>
    %c2_30 = arith.constant 2 : index
    %c0_31 = arith.constant 0 : index
    %c0_32 = arith.constant 0 : index
    %63 = vector.load %arg4[%c2_30, %c0_31, %c0_32] : memref<4x4x128xf32, #tpu.memory_space<vmem>>, vector<1x4x128xf32>
    %64 = vector.shape_cast %63 : vector<1x4x128xf32> to vector<4x128xf32>
    %65 = vector.shape_cast %64 : vector<4x128xf32> to vector<1x4x128xf32>
    %66 = vector.broadcast %56 : vector<2x1x128xf32> to vector<2x4x128xf32>
    %67 = vector.broadcast %62 : vector<1x4x128xf32> to vector<2x4x128xf32>
    %68 = arith.mulf %66, %67 : vector<2x4x128xf32>
    %69 = vector.broadcast %59 : vector<2x1x128xf32> to vector<2x4x128xf32>
    %70 = vector.broadcast %65 : vector<1x4x128xf32> to vector<2x4x128xf32>
    %71 = arith.mulf %69, %70 : vector<2x4x128xf32>
    %72 = arith.subf %68, %71 : vector<2x4x128xf32>
    %73 = vector.broadcast %56 : vector<2x1x128xf32> to vector<2x4x128xf32>
    %74 = vector.broadcast %65 : vector<1x4x128xf32> to vector<2x4x128xf32>
    %75 = arith.mulf %73, %74 : vector<2x4x128xf32>
    %76 = vector.broadcast %59 : vector<2x1x128xf32> to vector<2x4x128xf32>
    %77 = vector.broadcast %62 : vector<1x4x128xf32> to vector<2x4x128xf32>
    %78 = arith.mulf %76, %77 : vector<2x4x128xf32>
    %79 = arith.addf %75, %78 : vector<2x4x128xf32>
    %80 = arith.addf %52, %72 : vector<2x4x128xf32>
    %81 = arith.addf %53, %79 : vector<2x4x128xf32>
    %c3 = arith.constant 3 : index
    %c0_33 = arith.constant 0 : index
    %c0_34 = arith.constant 0 : index
    %82 = vector.load %arg1[%c3, %c0_33, %c0_34] : memref<4x2x128xf32, #tpu.memory_space<vmem>>, vector<1x2x128xf32>
    %83 = vector.shape_cast %82 : vector<1x2x128xf32> to vector<2x128xf32>
    %84 = vector.shape_cast %83 : vector<2x128xf32> to vector<2x1x128xf32>
    %c3_35 = arith.constant 3 : index
    %c0_36 = arith.constant 0 : index
    %c0_37 = arith.constant 0 : index
    %85 = vector.load %arg2[%c3_35, %c0_36, %c0_37] : memref<4x2x128xf32, #tpu.memory_space<vmem>>, vector<1x2x128xf32>
    %86 = vector.shape_cast %85 : vector<1x2x128xf32> to vector<2x128xf32>
    %87 = vector.shape_cast %86 : vector<2x128xf32> to vector<2x1x128xf32>
    %c3_38 = arith.constant 3 : index
    %c0_39 = arith.constant 0 : index
    %c0_40 = arith.constant 0 : index
    %88 = vector.load %arg3[%c3_38, %c0_39, %c0_40] : memref<4x4x128xf32, #tpu.memory_space<vmem>>, vector<1x4x128xf32>
    %89 = vector.shape_cast %88 : vector<1x4x128xf32> to vector<4x128xf32>
    %90 = vector.shape_cast %89 : vector<4x128xf32> to vector<1x4x128xf32>
    %c3_41 = arith.constant 3 : index
    %c0_42 = arith.constant 0 : index
    %c0_43 = arith.constant 0 : index
    %91 = vector.load %arg4[%c3_41, %c0_42, %c0_43] : memref<4x4x128xf32, #tpu.memory_space<vmem>>, vector<1x4x128xf32>
    %92 = vector.shape_cast %91 : vector<1x4x128xf32> to vector<4x128xf32>
    %93 = vector.shape_cast %92 : vector<4x128xf32> to vector<1x4x128xf32>
    %94 = vector.broadcast %84 : vector<2x1x128xf32> to vector<2x4x128xf32>
    %95 = vector.broadcast %90 : vector<1x4x128xf32> to vector<2x4x128xf32>
    %96 = arith.mulf %94, %95 : vector<2x4x128xf32>
    %97 = vector.broadcast %87 : vector<2x1x128xf32> to vector<2x4x128xf32>
    %98 = vector.broadcast %93 : vector<1x4x128xf32> to vector<2x4x128xf32>
    %99 = arith.mulf %97, %98 : vector<2x4x128xf32>
    %100 = arith.subf %96, %99 : vector<2x4x128xf32>
    %101 = vector.broadcast %84 : vector<2x1x128xf32> to vector<2x4x128xf32>
    %102 = vector.broadcast %93 : vector<1x4x128xf32> to vector<2x4x128xf32>
    %103 = arith.mulf %101, %102 : vector<2x4x128xf32>
    %104 = vector.broadcast %87 : vector<2x1x128xf32> to vector<2x4x128xf32>
    %105 = vector.broadcast %90 : vector<1x4x128xf32> to vector<2x4x128xf32>
    %106 = arith.mulf %104, %105 : vector<2x4x128xf32>
    %107 = arith.addf %103, %106 : vector<2x4x128xf32>
    %108 = arith.addf %80, %100 : vector<2x4x128xf32>
    %109 = arith.addf %81, %107 : vector<2x4x128xf32>
    %c0_44 = arith.constant 0 : index
    %c0_45 = arith.constant 0 : index
    %c0_46 = arith.constant 0 : index
    %110 = vector.load %arg5[%c0_44, %c0_45, %c0_46] : memref<2x4x128xf32, #tpu.memory_space<vmem>>, vector<2x4x128xf32>
    tpu.vector_store %arg5[%c0_44, %c0_45, %c0_46], %108 {strides = array<i32>} : memref<2x4x128xf32, #tpu.memory_space<vmem>>, vector<2x4x128xf32>,
    %c0_47 = arith.constant 0 : index
    %c0_48 = arith.constant 0 : index
    %c0_49 = arith.constant 0 : index
    %111 = vector.load %arg6[%c0_47, %c0_48, %c0_49] : memref<2x4x128xf32, #tpu.memory_space<vmem>>, vector<2x4x128xf32>
    tpu.vector_store %arg6[%c0_47, %c0_48, %c0_49], %109 {strides = array<i32>} : memref<2x4x128xf32, #tpu.memory_space<vmem>>, vector<2x4x128xf32>,
    return
  }
  func.func @transform_0(%arg0: i32) -> (i32, i32, i32) {
    %c0_i32 = arith.constant 0 : i32
    %c0_i32_0 = arith.constant 0 : i32
    %c0_i32_1 = arith.constant 0 : i32
    return %c0_i32, %c0_i32_0, %arg0 : i32, i32, i32
  }
  func.func @transform_1(%arg0: i32) -> (i32, i32, i32) {
    %c0_i32 = arith.constant 0 : i32
    %c0_i32_0 = arith.constant 0 : i32
    %c0_i32_1 = arith.constant 0 : i32
    return %c0_i32, %c0_i32_0, %arg0 : i32, i32, i32
  }
  func.func @transform_2(%arg0: i32) -> (i32, i32, i32) {
    %c0_i32 = arith.constant 0 : i32
    %c0_i32_0 = arith.constant 0 : i32
    %c0_i32_1 = arith.constant 0 : i32
    return %c0_i32, %c0_i32_0, %arg0 : i32, i32, i32
  }
  func.func @transform_3(%arg0: i32) -> (i32, i32, i32) {
    %c0_i32 = arith.constant 0 : i32
    %c0_i32_0 = arith.constant 0 : i32
    %c0_i32_1 = arith.constant 0 : i32
    return %c0_i32, %c0_i32_0, %arg0 : i32, i32, i32
  }
  func.func @transform_4(%arg0: i32) -> (i32, i32, i32) {
    %c0_i32 = arith.constant 0 : i32
    %c0_i32_0 = arith.constant 0 : i32
    %c0_i32_1 = arith.constant 0 : i32
    return %c0_i32, %c0_i32_0, %arg0 : i32, i32, i32
  }
  func.func @transform_5(%arg0: i32) -> (i32, i32, i32) {
    %c0_i32 = arith.constant 0 : i32
    %c0_i32_0 = arith.constant 0 : i32
    %c0_i32_1 = arith.constant 0 : i32
    return %c0_i32, %c0_i32_0, %arg0 : i32, i32, i32
  }
}

</mosaic_0001>

<llo_original>
// kernel: tpu_custom_call.1
$region0: #{tpu_custom_call.1}
  #allocation0 [shape = 'u32[]', space=smem, size = 0x4, offset = 0x4, fixed_abs, tag = 'smem constant byte address 0x4 - core index']
  #allocation1 [shape = 'u32[144,128]{1,0:T(1,128)}', space=vmem, size = 0x12000, scoped, tag = 'internal scratch']
  %s0 = inlined_call_operand.hbm [shape: f32[4,2,128], index: 0, kind: input, shape index: {}]
  %s1 = inlined_call_operand.hbm [shape: f32[4,2,128], index: 1, kind: input, shape index: {}]
  %s2 = inlined_call_operand.hbm [shape: f32[4,4,128], index: 2, kind: input, shape index: {}]
  %s3 = inlined_call_operand.hbm [shape: f32[4,4,128], index: 3, kind: input, shape index: {}]
  %s4 = inlined_call_operand.hbm [shape: f32[2,4,128], index: 4, kind: output, shape index: {0}]
  %s5 = inlined_call_operand.hbm [shape: f32[2,4,128], index: 5, kind: output, shape index: {1}]
  %6 = xla_tuple %s4, %s5
  %s7 = sld [smem:[#allocation0]]
  $region50: #{tpu_custom_call.1} parent=0
    _
  %s9 = ssub.s32 1, %s7
  %s10 = scalar_select 0, %s9, %s7
  $region1: #{tpu_custom_call.1} parent=0
    #allocation2 [shape = 'u8[4096]{0}', space=vmem, size = 0x1000, scoped, tag = 'input window, operand 0, single buffered']
    #allocation3 [shape = 's32[1]{0}', space=sflag, size = 0x4, scoped, tag = 'scoped memory for tpu_custom_call.1']
    #allocation4 [shape = 's32[1]{0}', space=sflag, size = 0x4, scoped, tag = 'scoped memory for tpu_custom_call.1']
    #allocation5 [shape = 'u8[4096]{0}', space=vmem, size = 0x1000, scoped, tag = 'input window, operand 1, single buffered']
    #allocation6 [shape = 's32[1]{0}', space=sflag, size = 0x4, scoped, tag = 'scoped memory for tpu_custom_call.1']
    #allocation7 [shape = 'u8[8192]{0}', space=vmem, size = 0x2000, scoped, tag = 'input window, operand 2, single buffered']
    #allocation8 [shape = 'u8[8192]{0}', space=vmem, size = 0x2000, scoped, tag = 'input window, operand 3, single buffered']
    #allocation9 [shape = 's32[1]{0}', space=sflag, size = 0x4, scoped, tag = 'scoped memory for tpu_custom_call.1']
    #allocation10 [shape = 'u8[4096]{0}', space=vmem, size = 0x1000, scoped, tag = 'output window, operand 0, single buffered']
    #allocation11 [shape = 'u8[4096]{0}', space=vmem, size = 0x1000, scoped, tag = 'output window, operand 1, single buffered']
    #allocation12 [shape = 's32[1]{0}', space=sflag, size = 0x4, scoped, tag = 'scoped memory for tpu_custom_call.1']
    %11 = vsyncpa [#allocation3], 0
    %12 = vsyncpa [#allocation6], 0
    %13 = vsyncpa [#allocation9], 0
    %14 = vsyncpa [#allocation4], 0
    %15 = vsyncpa [#allocation12], 0
    // Predicated region
    $region2: #{tpu_custom_call.1} parent=1 // pred_check
      _
    $region3: #{tpu_custom_call.1} parent=1 // pred_check_branch
      %17 = sbr.rel (0) target = $region5
    $region4: #{tpu_custom_call.1} parent=1 // pred_region
      %s19 = ssub.s32 128, 128
      %20 = vsyncadd [#allocation3], %s19
      %s21 = sshll.u32 [#allocation2], 4
      %s22 = int_to_ptr.vmem [resolvable:$true] %s21
      %27 = dma.hbm_to_vmem [thread:$0]  %s0, 128, %s22, [#allocation3], 32, 32, 2
    $region5: #{tpu_custom_call.1} parent=1 // pred_fallthru
      _
    // Predicated region
    $region6: #{tpu_custom_call.1} parent=1 // pred_check
      _
    $region7: #{tpu_custom_call.1} parent=1 // pred_check_branch
      %29 = sbr.rel (0) target = $region9
    $region8: #{tpu_custom_call.1} parent=1 // pred_region
      %s31 = ssub.s32 128, 128
      %32 = vsyncadd [#allocation6], %s31
      %s33 = sshll.u32 [#allocation5], 4
      %s34 = int_to_ptr.vmem [resolvable:$true] %s33
      %39 = dma.hbm_to_vmem [thread:$0]  %s1, 128, %s34, [#allocation6], 32, 32, 2
    $region9: #{tpu_custom_call.1} parent=1 // pred_fallthru
      _
    // Predicated region
    $region10: #{tpu_custom_call.1} parent=1 // pred_check
      _
    $region11: #{tpu_custom_call.1} parent=1 // pred_check_branch
      %41 = sbr.rel (0) target = $region13
    $region12: #{tpu_custom_call.1} parent=1 // pred_region
      %s43 = ssub.s32 256, 256
      %44 = vsyncadd [#allocation6], %s43
      %s45 = sshll.u32 [#allocation7], 4
      %s46 = int_to_ptr.vmem [resolvable:$true] %s45
      %51 = dma.hbm_to_vmem [thread:$0]  %s2, 256, %s46, [#allocation6], 64, 64, 4
    $region13: #{tpu_custom_call.1} parent=1 // pred_fallthru
      _
    // Predicated region
    $region14: #{tpu_custom_call.1} parent=1 // pred_check
      _
    $region15: #{tpu_custom_call.1} parent=1 // pred_check_branch
      %53 = sbr.rel (0) target = $region17
    $region16: #{tpu_custom_call.1} parent=1 // pred_region
      %s55 = ssub.s32 256, 256
      %56 = vsyncadd [#allocation9], %s55
      %s57 = sshll.u32 [#allocation8], 4
      %s58 = int_to_ptr.vmem [resolvable:$true] %s57
      %63 = dma.hbm_to_vmem [thread:$0]  %s3, 256, %s58, [#allocation9], 64, 64, 4
    $region17: #{tpu_custom_call.1} parent=1 // pred_fallthru
      _
    // Predicated region
    $region18: #{tpu_custom_call.1} parent=1 // pred_check
      _
    $region19: #{tpu_custom_call.1} parent=1 // pred_check_branch
      %65 = sbr.rel (0) target = $region21
    $region20: #{tpu_custom_call.1} parent=1 // pred_region
      %66 = dma.done [#allocation3], 128
    $region21: #{tpu_custom_call.1} parent=1 // pred_fallthru
      _
    // Predicated region
    $region22: #{tpu_custom_call.1} parent=1 // pred_check
      _
    $region23: #{tpu_custom_call.1} parent=1 // pred_check_branch
      %68 = sbr.rel (0) target = $region25
    $region24: #{tpu_custom_call.1} parent=1 // pred_region
      %69 = dma.done [#allocation6], 128
    $region25: #{tpu_custom_call.1} parent=1 // pred_fallthru
      _
    // Predicated region
    $region26: #{tpu_custom_call.1} parent=1 // pred_check
      _
    $region27: #{tpu_custom_call.1} parent=1 // pred_check_branch
      %71 = sbr.rel (0) target = $region29
    $region28: #{tpu_custom_call.1} parent=1 // pred_region
      %72 = dma.done [#allocation6], 256
    $region29: #{tpu_custom_call.1} parent=1 // pred_fallthru
      _
    // Predicated region
    $region30: #{tpu_custom_call.1} parent=1 // pred_check
      _
    $region31: #{tpu_custom_call.1} parent=1 // pred_check_branch
      %74 = sbr.rel (0) target = $region33
    $region32: #{tpu_custom_call.1} parent=1 // pred_region
      %75 = dma.done [#allocation9], 256
    $region33: #{tpu_custom_call.1} parent=1 // pred_fallthru
      _
    %v76 = vld [vmem:[#allocation2] sm:$0x3]
    %v79 = vunpack.c.l.s4 1966171168
    %v80 = vunpack.c.0.s8 %v79
    %v81 = vlaneseq
    %v82 = vshrl.u32 %v81, 7
    %v83 = vsub.s32 %v80, %v82
    %v84 = vrot.slane %v76, %v83
    %v85 = vcombine.high %v84, %v84
    %v87 = vunpack.c.l.s4 1966171168
    %v88 = vunpack.c.0.s8 %v87
    %v89 = vlaneseq
    %v90 = vshrl.u32 %v89, 7
    %v91 = vsub.s32 %v88, %v90
    %v92 = vrot.slane %v84, %v91
    %v94 = vunpack.c.l.s4 1966171168
    %v95 = vunpack.c.0.s8 %v94
    %v96 = vlaneseq
    %v97 = vshrl.u32 %v96, 7
    %v98 = vsub.s32 %v95, %v97
    %v99 = vrot.slane %v85, %v98
    %v100 = vld [vmem:[#allocation5] sm:$0x3]
    %v103 = vunpack.c.l.s4 1966171168
    %v104 = vunpack.c.0.s8 %v103
    %v105 = vlaneseq
    %v106 = vshrl.u32 %v105, 7
    %v107 = vsub.s32 %v104, %v106
    %v108 = vrot.slane %v100, %v107
    %v109 = vcombine.high %v108, %v108
    %v111 = vunpack.c.l.s4 1966171168
    %v112 = vunpack.c.0.s8 %v111
    %v113 = vlaneseq
    %v114 = vshrl.u32 %v113, 7
    %v115 = vsub.s32 %v112, %v114
    %v116 = vrot.slane %v108, %v115
    %v118 = vunpack.c.l.s4 1966171168
    %v119 = vunpack.c.0.s8 %v118
    %v120 = vlaneseq
    %v121 = vshrl.u32 %v120, 7
    %v122 = vsub.s32 %v119, %v121
    %v123 = vrot.slane %v109, %v122
    %v124 = vld [vmem:[#allocation7] sm:$0xf]
    %v125 = vld [vmem:[#allocation8] sm:$0xf]
    %v126 = vlaneseq
    %v127 = vshrl.u32 %v126, 7
    %v128 = vsub.s32 0, %v127
    %v129 = vrot.slane %v92, %v128
    %v130 = vlaneseq
    %v131 = vshrl.u32 %v130, 7
    %v132 = vsub.s32 0, %v131
    %v133 = vrot.slane %v99, %v132
    %v136 = vmul.f32 %v129, %v124
    %v137 = vmul.f32 %v133, %v124
    %v138 = vlaneseq
    %v139 = vshrl.u32 %v138, 7
    %v140 = vsub.s32 0, %v139
    %v141 = vrot.slane %v116, %v140
    %v142 = vlaneseq
    %v143 = vshrl.u32 %v142, 7
    %v144 = vsub.s32 0, %v143
    %v145 = vrot.slane %v123, %v144
    %v148 = vmul.f32 %v141, %v125
    %v149 = vmul.f32 %v145, %v125
    %v150 = vsub.f32 %v136, %v148
    %v151 = vsub.f32 %v137, %v149
    %v152 = vmul.f32 %v129, %v125
    %v153 = vmul.f32 %v133, %v125
    %v154 = vmul.f32 %v141, %v124
    %v155 = vmul.f32 %v145, %v124
    %v156 = vadd.f32 %v152, %v154
    %v157 = vadd.f32 %v153, %v155
    %s158 = scalar_lea.vmem [#allocation2], 2
    %v159 = vld [vmem:[%s158] sm:$0x3]
    %v162 = vunpack.c.l.s4 1966171168
    %v163 = vunpack.c.0.s8 %v162
    %v164 = vlaneseq
    %v165 = vshrl.u32 %v164, 7
    %v166 = vsub.s32 %v163, %v165
    %v167 = vrot.slane %v159, %v166
    %v168 = vcombine.high %v167, %v167
    %v170 = vunpack.c.l.s4 1966171168
    %v171 = vunpack.c.0.s8 %v170
    %v172 = vlaneseq
    %v173 = vshrl.u32 %v172, 7
    %v174 = vsub.s32 %v171, %v173
    %v175 = vrot.slane %v167, %v174
    %v177 = vunpack.c.l.s4 1966171168
    %v178 = vunpack.c.0.s8 %v177
    %v179 = vlaneseq
    %v180 = vshrl.u32 %v179, 7
    %v181 = vsub.s32 %v178, %v180
    %v182 = vrot.slane %v168, %v181
    %s183 = scalar_lea.vmem [#allocation5], 2
    %v184 = vld [vmem:[%s183] sm:$0x3]
    %v187 = vunpack.c.l.s4 1966171168
    %v188 = vunpack.c.0.s8 %v187
    %v189 = vlaneseq
    %v190 = vshrl.u32 %v189, 7
    %v191 = vsub.s32 %v188, %v190
    %v192 = vrot.slane %v184, %v191
    %v193 = vcombine.high %v192, %v192
    %v195 = vunpack.c.l.s4 1966171168
    %v196 = vunpack.c.0.s8 %v195
    %v197 = vlaneseq
    %v198 = vshrl.u32 %v197, 7
    %v199 = vsub.s32 %v196, %v198
    %v200 = vrot.slane %v192, %v199
    %v202 = vunpack.c.l.s4 1966171168
    %v203 = vunpack.c.0.s8 %v202
    %v204 = vlaneseq
    %v205 = vshrl.u32 %v204, 7
    %v206 = vsub.s32 %v203, %v205
    %v207 = vrot.slane %v193, %v206
    %s208 = scalar_lea.vmem [#allocation7], 4
    %v209 = vld [vmem:[%s208] sm:$0xf]
    %s210 = scalar_lea.vmem [#allocation8], 4
    %v211 = vld [vmem:[%s210] sm:$0xf]
    %v212 = vlaneseq
    %v213 = vshrl.u32 %v212, 7
    %v214 = vsub.s32 0, %v213
    %v215 = vrot.slane %v175, %v214
    %v216 = vlaneseq
    %v217 = vshrl.u32 %v216, 7
    %v218 = vsub.s32 0, %v217
    %v219 = vrot.slane %v182, %v218
    %v222 = vmul.f32 %v215, %v209
    %v223 = vmul.f32 %v219, %v209
    %v224 = vlaneseq
    %v225 = vshrl.u32 %v224, 7
    %v226 = vsub.s32 0, %v225
    %v227 = vrot.slane %v200, %v226
    %v228 = vlaneseq
    %v229 = vshrl.u32 %v228, 7
    %v230 = vsub.s32 0, %v229
    %v231 = vrot.slane %v207, %v230
    %v234 = vmul.f32 %v227, %v211
    %v235 = vmul.f32 %v231, %v211
    %v236 = vsub.f32 %v222, %v234
    %v237 = vsub.f32 %v223, %v235
    %v238 = vmul.f32 %v215, %v211
    %v239 = vmul.f32 %v219, %v211
    %v240 = vmul.f32 %v227, %v209
    %v241 = vmul.f32 %v231, %v209
    %v242 = vadd.f32 %v238, %v240
    %v243 = vadd.f32 %v239, %v241
    %v244 = vadd.f32 %v150, %v236
    %v245 = vadd.f32 %v151, %v237
    %v246 = vadd.f32 %v156, %v242
    %v247 = vadd.f32 %v157, %v243
    %s248 = scalar_lea.vmem [#allocation2], 4
    %v249 = vld [vmem:[%s248] sm:$0x3]
    %v252 = vunpack.c.l.s4 1966171168
    %v253 = vunpack.c.0.s8 %v252
    %v254 = vlaneseq
    %v255 = vshrl.u32 %v254, 7
    %v256 = vsub.s32 %v253, %v255
    %v257 = vrot.slane %v249, %v256
    %v258 = vcombine.high %v257, %v257
    %v260 = vunpack.c.l.s4 1966171168
    %v261 = vunpack.c.0.s8 %v260
    %v262 = vlaneseq
    %v263 = vshrl.u32 %v262, 7
    %v264 = vsub.s32 %v261, %v263
    %v265 = vrot.slane %v257, %v264
    %v267 = vunpack.c.l.s4 1966171168
    %v268 = vunpack.c.0.s8 %v267
    %v269 = vlaneseq
    %v270 = vshrl.u32 %v269, 7
    %v271 = vsub.s32 %v268, %v270
    %v272 = vrot.slane %v258, %v271
    %s273 = scalar_lea.vmem [#allocation5], 4
    %v274 = vld [vmem:[%s273] sm:$0x3]
    %v277 = vunpack.c.l.s4 1966171168
    %v278 = vunpack.c.0.s8 %v277
    %v279 = vlaneseq
    %v280 = vshrl.u32 %v279, 7
    %v281 = vsub.s32 %v278, %v280
    %v282 = vrot.slane %v274, %v281
    %v283 = vcombine.high %v282, %v282
    %v285 = vunpack.c.l.s4 1966171168
    %v286 = vunpack.c.0.s8 %v285
    %v287 = vlaneseq
    %v288 = vshrl.u32 %v287, 7
    %v289 = vsub.s32 %v286, %v288
    %v290 = vrot.slane %v282, %v289
    %v292 = vunpack.c.l.s4 1966171168
    %v293 = vunpack.c.0.s8 %v292
    %v294 = vlaneseq
    %v295 = vshrl.u32 %v294, 7
    %v296 = vsub.s32 %v293, %v295
    %v297 = vrot.slane %v283, %v296
    %s298 = scalar_lea.vmem [#allocation7], 8
    %v299 = vld [vmem:[%s298] sm:$0xf]
    %s300 = scalar_lea.vmem [#allocation8], 8
    %v301 = vld [vmem:[%s300] sm:$0xf]
    %v302 = vlaneseq
    %v303 = vshrl.u32 %v302, 7
    %v304 = vsub.s32 0, %v303
    %v305 = vrot.slane %v265, %v304
    %v306 = vlaneseq
    %v307 = vshrl.u32 %v306, 7
    %v308 = vsub.s32 0, %v307
    %v309 = vrot.slane %v272, %v308
    %v312 = vmul.f32 %v305, %v299
    %v313 = vmul.f32 %v309, %v299
    %v314 = vlaneseq
    %v315 = vshrl.u32 %v314, 7
    %v316 = vsub.s32 0, %v315
    %v317 = vrot.slane %v290, %v316
    %v318 = vlaneseq
    %v319 = vshrl.u32 %v318, 7
    %v320 = vsub.s32 0, %v319
    %v321 = vrot.slane %v297, %v320
    %v324 = vmul.f32 %v317, %v301
    %v325 = vmul.f32 %v321, %v301
    %v326 = vsub.f32 %v312, %v324
    %v327 = vsub.f32 %v313, %v325
    %v328 = vmul.f32 %v305, %v301
    %v329 = vmul.f32 %v309, %v301
    %v330 = vmul.f32 %v317, %v299
    %v331 = vmul.f32 %v321, %v299
    %v332 = vadd.f32 %v328, %v330
    %v333 = vadd.f32 %v329, %v331
    %v334 = vadd.f32 %v244, %v326
    %v335 = vadd.f32 %v245, %v327
    %v336 = vadd.f32 %v246, %v332
    %v337 = vadd.f32 %v247, %v333
    %s338 = scalar_lea.vmem [#allocation2], 6
    %v339 = vld [vmem:[%s338] sm:$0x3]
    %v342 = vunpack.c.l.s4 1966171168
    %v343 = vunpack.c.0.s8 %v342
    %v344 = vlaneseq
    %v345 = vshrl.u32 %v344, 7
    %v346 = vsub.s32 %v343, %v345
    %v347 = vrot.slane %v339, %v346
    %v348 = vcombine.high %v347, %v347
    %v350 = vunpack.c.l.s4 1966171168
    %v351 = vunpack.c.0.s8 %v350
    %v352 = vlaneseq
    %v353 = vshrl.u32 %v352, 7
    %v354 = vsub.s32 %v351, %v353
    %v355 = vrot.slane %v347, %v354
    %v357 = vunpack.c.l.s4 1966171168
    %v358 = vunpack.c.0.s8 %v357
    %v359 = vlaneseq
    %v360 = vshrl.u32 %v359, 7
    %v361 = vsub.s32 %v358, %v360
    %v362 = vrot.slane %v348, %v361
    %s363 = scalar_lea.vmem [#allocation5], 6
    %v364 = vld [vmem:[%s363] sm:$0x3]
    %v367 = vunpack.c.l.s4 1966171168
    %v368 = vunpack.c.0.s8 %v367
    %v369 = vlaneseq
    %v370 = vshrl.u32 %v369, 7
    %v371 = vsub.s32 %v368, %v370
    %v372 = vrot.slane %v364, %v371
    %v373 = vcombine.high %v372, %v372
    %v375 = vunpack.c.l.s4 1966171168
    %v376 = vunpack.c.0.s8 %v375
    %v377 = vlaneseq
    %v378 = vshrl.u32 %v377, 7
    %v379 = vsub.s32 %v376, %v378
    %v380 = vrot.slane %v372, %v379
    %v382 = vunpack.c.l.s4 1966171168
    %v383 = vunpack.c.0.s8 %v382
    %v384 = vlaneseq
    %v385 = vshrl.u32 %v384, 7
    %v386 = vsub.s32 %v383, %v385
    %v387 = vrot.slane %v373, %v386
    %s388 = scalar_lea.vmem [#allocation7], 12
    %v389 = vld [vmem:[%s388] sm:$0xf]
    %s390 = scalar_lea.vmem [#allocation8], 12
    %v391 = vld [vmem:[%s390] sm:$0xf]
    %v392 = vlaneseq
    %v393 = vshrl.u32 %v392, 7
    %v394 = vsub.s32 0, %v393
    %v395 = vrot.slane %v355, %v394
    %v396 = vlaneseq
    %v397 = vshrl.u32 %v396, 7
    %v398 = vsub.s32 0, %v397
    %v399 = vrot.slane %v362, %v398
    %v402 = vmul.f32 %v395, %v389
    %v403 = vmul.f32 %v399, %v389
    %v404 = vlaneseq
    %v405 = vshrl.u32 %v404, 7
    %v406 = vsub.s32 0, %v405
    %v407 = vrot.slane %v380, %v406
    %v408 = vlaneseq
    %v409 = vshrl.u32 %v408, 7
    %v410 = vsub.s32 0, %v409
    %v411 = vrot.slane %v387, %v410
    %v414 = vmul.f32 %v407, %v391
    %v415 = vmul.f32 %v411, %v391
    %v416 = vsub.f32 %v402, %v414
    %v417 = vsub.f32 %v403, %v415
    %v418 = vmul.f32 %v395, %v391
    %v419 = vmul.f32 %v399, %v391
    %v420 = vmul.f32 %v407, %v389
    %v421 = vmul.f32 %v411, %v389
    %v422 = vadd.f32 %v418, %v420
    %v423 = vadd.f32 %v419, %v421
    %v424 = vadd.f32 %v334, %v416
    %v425 = vadd.f32 %v335, %v417
    %v426 = vadd.f32 %v336, %v422
    %v427 = vadd.f32 %v337, %v423
    %428 = vst [vmem:[#allocation10] sm:$0xf] %v424
    %429 = vst [vmem:[#allocation10 + $0x4] sm:$0xf] %v425
    %430 = vst [vmem:[#allocation11] sm:$0xf] %v426
    %431 = vst [vmem:[#allocation11 + $0x4] sm:$0xf] %v427
    // Predicated region
    $region34: #{tpu_custom_call.1} parent=1 // pred_check
      _
    $region35: #{tpu_custom_call.1} parent=1 // pred_check_branch
      %433 = sbr.rel (0) target = $region37
    $region36: #{tpu_custom_call.1} parent=1 // pred_region
      %s435 = ssub.s32 128, 128
      %436 = vsyncadd [#allocation4], %s435
      %s437 = sshll.u32 [#allocation10], 4
      %s438 = int_to_ptr.vmem [resolvable:$true] %s437
      %443 = dma.vmem_to_hbm [thread:$0]  %s438, 128, %s4, [#allocation4], 64, 64, 4
    $region37: #{tpu_custom_call.1} parent=1 // pred_fallthru
      _
    // Predicated region
    $region38: #{tpu_custom_call.1} parent=1 // pred_check
      _
    $region39: #{tpu_custom_call.1} parent=1 // pred_check_branch
      %445 = sbr.rel (0) target = $region41
    $region40: #{tpu_custom_call.1} parent=1 // pred_region
      %s447 = ssub.s32 128, 128
      %448 = vsyncadd [#allocation12], %s447
      %s449 = sshll.u32 [#allocation11], 4
      %s450 = int_to_ptr.vmem [resolvable:$true] %s449
      %455 = dma.vmem_to_hbm [thread:$0]  %s450, 128, %s5, [#allocation12], 64, 64, 4
    $region41: #{tpu_custom_call.1} parent=1 // pred_fallthru
      _
    // Predicated region
    $region42: #{tpu_custom_call.1} parent=1 // pred_check
      _
    $region43: #{tpu_custom_call.1} parent=1 // pred_check_branch
      %457 = sbr.rel (0) target = $region45
    $region44: #{tpu_custom_call.1} parent=1 // pred_region
      %458 = dma.done [#allocation4], 128
    $region45: #{tpu_custom_call.1} parent=1 // pred_fallthru
      _
    // Predicated region
    $region46: #{tpu_custom_call.1} parent=1 // pred_check
      _
    $region47: #{tpu_custom_call.1} parent=1 // pred_check_branch
      %460 = sbr.rel (0) target = $region49
    $region48: #{tpu_custom_call.1} parent=1 // pred_region
      %461 = dma.done [#allocation12], 128
    $region49: #{tpu_custom_call.1} parent=1 // pred_fallthru
      _
    %462 = vsyncpa [#allocation3], 1
    %463 = vsyncpa [#allocation6], 1
    %464 = vsyncpa [#allocation9], 1
    %465 = vsyncpa [#allocation4], 1
    %466 = vsyncpa [#allocation12], 1

</llo_original>
